<compile_context>
chip_gen: v5e
topology: v5e:2x2
jax: 0.10.0
libtpu: 0.0.40
codegen_flags: <defaults>
</compile_context>

<pallas_src>
import functools

import jax
import jax.numpy as jnp
import numpy as np
from jax.experimental import pallas as pl
from jax.experimental.pallas import tpu as pltpu

LANE = 128  # TPU lane width; hidden/output feature dims are padded to this.


def _round_up(x, m):
    return ((x + m - 1) // m) * m


def critic_kernel(state_ref, action_ref,
                  w0_ref, b0_ref,
                  w1a_ref, w1b_ref, b1_ref,
                  w2_ref, b2_ref,
                  w3_ref, b3_ref,
                  out_ref):
    """Four fused Linear layers (+ ReLU) over one batch tile.

    Matmul operands are cast to the weights' dtype (bf16 by default) so the MXU
    runs at native width; accumulation is f32 (preferred_element_type) and all
    elementwise work (bias add, ReLU) stays in f32.
    """
    cdt = w0_ref.dtype

    s = state_ref[...]
    a = action_ref[...]

    # layer 0: state -> hidden1, relu
    r1 = jnp.dot(s.astype(cdt), w0_ref[...],
                 preferred_element_type=jnp.float32) + b0_ref[...]
    r1 = jnp.maximum(r1, 0.0)

    # layer 1: cat([r1, action]) -> hidden2, relu  (split-weight form of the concat)
    r2 = (jnp.dot(r1.astype(cdt), w1a_ref[...],
                  preferred_element_type=jnp.float32)
          + jnp.dot(a.astype(cdt), w1b_ref[...],
                    preferred_element_type=jnp.float32)
          + b1_ref[...])
    r2 = jnp.maximum(r2, 0.0)

    # layer 2: hidden2 -> hidden3, relu
    r3 = jnp.dot(r2.astype(cdt), w2_ref[...],
                 preferred_element_type=jnp.float32) + b2_ref[...]
    r3 = jnp.maximum(r3, 0.0)

    # layer 3 (out_layer): hidden3 -> output (lane-padded), no activation
    r4 = jnp.dot(r3.astype(cdt), w3_ref[...],
                 preferred_element_type=jnp.float32) + b3_ref[...]
    out_ref[...] = r4.astype(out_ref.dtype)


@functools.partial(jax.jit, static_argnames=("out_dim", "tile_b"))
def critic_forward(state, action, padded_params, out_dim, tile_b=512):
    """Gridded-over-batch Pallas call. Expects lane-padded params (prepare_params)."""
    (w0, b0, w1a, w1b, b1, w2, b2, w3, b3) = padded_params
    batch, in1 = state.shape
    in2 = action.shape[1]
    h1p, h2p, h3p, outp = w0.shape[1], w1a.shape[1], w2.shape[1], w3.shape[1]

    tb = min(tile_b, _round_up(batch, 8))
    grid = (pl.cdiv(batch, tb),)

    def batch_map(i):
        return (i, 0)

    def const_map(i):
        return (0, 0)

    def full(arr):
        return pl.BlockSpec(arr.shape, const_map)

    in_specs = [
        pl.BlockSpec((tb, in1), batch_map),
        pl.BlockSpec((tb, in2), batch_map),
        full(w0), full(b0),
        full(w1a), full(w1b), full(b1),
        full(w2), full(b2),
        full(w3), full(b3),
    ]
    out_specs = pl.BlockSpec((tb, outp), batch_map)

    flops = 2 * batch * (in1 * h1p + (h1p + in2) * h2p + h2p * h3p + h3p * outp)
    bytes_accessed = (
        state.size * state.dtype.itemsize
        + action.size * action.dtype.itemsize
        + sum(int(p.size) * p.dtype.itemsize for p in padded_params)
        + batch * outp * 4)

    out_padded = pl.pallas_call(
        critic_kernel,
        out_shape=jax.ShapeDtypeStruct((batch, outp), jnp.float32),
        grid=grid,
        in_specs=in_specs,
        out_specs=out_specs,
        compiler_params=pltpu.CompilerParams(
            dimension_semantics=("parallel",)),
        cost_estimate=pl.CostEstimate(
            flops=flops, transcendentals=0, bytes_accessed=bytes_accessed),
    )(state, action, w0, b0, w1a, w1b, b1, w2, b2, w3, b3)

    return out_padded[:, :out_dim]


def init_critic_params(key, input1, input2, hidden1, hidden2, hidden3, output,
                       init_weight=0.003):
    """Deterministic re-implementation of the module's __init__ (weights stored
    pre-transposed as (in, out) so the kernel does plain x @ W)."""
    ks = jax.random.split(key, 8)

    def uniform(k, shape, bound):
        return jax.random.uniform(k, shape, jnp.float32, -bound, bound)

    # input_layer: Linear(input1, hidden1); nn_init_weight bound = 1/sqrt(out_features)
    w0 = uniform(ks[0], (input1, hidden1), 1.0 / np.sqrt(hidden1))
    b0 = uniform(ks[1], (1, hidden1), 1.0 / np.sqrt(input1))          # PyTorch default bias init

    # hidden_layer1: Linear(hidden1 + input2, hidden2), split into [hidden1 | input2]
    bw1 = 1.0 / np.sqrt(hidden2)
    w1a = uniform(ks[2], (hidden1, hidden2), bw1)
    w1b = uniform(ks[3], (input2, hidden2), bw1)
    b1 = uniform(ks[4], (1, hidden2), 1.0 / np.sqrt(hidden1 + input2))

    # hidden_layer2: Linear(hidden2, hidden3), weight ~ U(-init_weight, init_weight)
    w2 = uniform(ks[5], (hidden2, hidden3), init_weight)
    b2 = uniform(ks[6], (1, hidden3), 1.0 / np.sqrt(hidden2))

    # out_layer: Linear(hidden3, output), PyTorch default init
    bw3 = 1.0 / np.sqrt(hidden3)
    w3 = uniform(ks[7], (hidden3, output), bw3)
    b3 = jnp.zeros((1, output), jnp.float32)

    return (w0, b0, w1a, w1b, b1, w2, b2, w3, b3)


def prepare_params(params, compute_dtype=jnp.bfloat16):
    """Zero-pad hidden/output feature dims to the 128-lane width and cast weights
    to the MXU compute dtype (biases stay f32). Padding is semantics-preserving:
    padded hidden columns are exactly 0 after bias-add(0)+ReLU and hit zero-padded
    weight rows of the next layer; padded output columns are sliced off."""
    (w0, b0, w1a, w1b, b1, w2, b2, w3, b3) = params
    in1, h1 = w0.shape
    in2, h2 = w1b.shape
    h3 = w2.shape[1]
    out = w3.shape[1]
    h1p, h2p, h3p, outp = (_round_up(d, LANE) for d in (h1, h2, h3, out))

    def pad2(x, rows, cols):
        return jnp.pad(x, ((0, rows - x.shape[0]), (0, cols - x.shape[1])))

    w0p = pad2(w0, in1, h1p).astype(compute_dtype)
    b0p = pad2(b0, 1, h1p)
    w1ap = pad2(w1a, h1p, h2p).astype(compute_dtype)
    w1bp = pad2(w1b, in2, h2p).astype(compute_dtype)
    b1p = pad2(b1, 1, h2p)
    w2p = pad2(w2, h2p, h3p).astype(compute_dtype)
    b2p = pad2(b2, 1, h3p)
    w3p = pad2(w3, h3p, outp).astype(compute_dtype)
    b3p = pad2(b3, 1, outp)
    return (w0p, b0p, w1ap, w1bp, b1p, w2p, b2p, w3p, b3p)


def critic_reference(state, action, params):
    """Pure-JAX f32 reference matching the PyTorch forward exactly."""
    (w0, b0, w1a, w1b, b1, w2, b2, w3, b3) = params
    w1 = jnp.concatenate([w1a, w1b], axis=0)  # (hidden1 + input2, hidden2)
    r1 = jax.nn.relu(state @ w0 + b0)
    r2 = jax.nn.relu(jnp.concatenate([r1, action], axis=1) @ w1 + b1)
    r3 = jax.nn.relu(r2 @ w2 + b2)
    return r3 @ w3 + b3


if __name__ == "__main__":
    # Shapes consistent with the module's forward (batch chosen to exercise the grid).
    batch, input1, input2 = 256, 16, 8
    hidden1, hidden2, hidden3, output = 32, 32, 32, 1

    key = jax.random.PRNGKey(0)
    k_state, k_action, k_params = jax.random.split(key, 3)

    state = jax.random.normal(k_state, (batch, input1), jnp.float32)
    action = jax.random.normal(k_action, (batch, input2), jnp.float32)
    params = init_critic_params(k_params, input1, input2,
                                hidden1, hidden2, hidden3, output)
    padded_params = prepare_params(params, compute_dtype=jnp.bfloat16)

    out = critic_forward(state, action, padded_params, out_dim=output, tile_b=128)
    jax.block_until_ready(out)

    ref = critic_reference(state, action, params)
    # bf16 matmul operands with f32 accumulation -> loosened tolerance vs f32 reference.
    np.testing.assert_allclose(np.asarray(out), np.asarray(ref), rtol=2e-2, atol=1e-2)

    assert out.shape == (batch, output)
    print("KERNEL_OK")
</pallas_src>

<mosaic_0001>
module attributes {stable_mosaic.version = 11 : i64} {
  func.func @critic_kernel(%arg0: i32, %arg1: memref<128x16xf32, #tpu.memory_space<vmem>>, %arg2: memref<128x8xf32, #tpu.memory_space<vmem>>, %arg3: memref<16x128xbf16, #tpu.memory_space<vmem>>, %arg4: memref<1x128xf32, #tpu.memory_space<vmem>>, %arg5: memref<128x128xbf16, #tpu.memory_space<vmem>>, %arg6: memref<8x128xbf16, #tpu.memory_space<vmem>>, %arg7: memref<1x128xf32, #tpu.memory_space<vmem>>, %arg8: memref<128x128xbf16, #tpu.memory_space<vmem>>, %arg9: memref<1x128xf32, #tpu.memory_space<vmem>>, %arg10: memref<128x128xbf16, #tpu.memory_space<vmem>>, %arg11: memref<1x128xf32, #tpu.memory_space<vmem>>, %arg12: memref<128x128xf32, #tpu.memory_space<vmem>>) attributes {dimension_semantics = [#tpu.dimension_semantics<parallel>], iteration_bounds = array<i64: 2>, scalar_prefetch = 0 : i64, scratch_operands = 0 : i64, tpu.core_type = #tpu.core_type<tc>, window_params = [{transform_indices = @transform_0, window_bounds = array<i64: 128, 16>}, {transform_indices = @transform_1, window_bounds = array<i64: 128, 8>}, {pipeline_mode = #tpu.pipeline_mode<synchronous>, transform_indices = @transform_2, window_bounds = array<i64: 16, 128>}, {pipeline_mode = #tpu.pipeline_mode<synchronous>, transform_indices = @transform_3, window_bounds = array<i64: 1, 128>}, {pipeline_mode = #tpu.pipeline_mode<synchronous>, transform_indices = @transform_4, window_bounds = array<i64: 128, 128>}, {pipeline_mode = #tpu.pipeline_mode<synchronous>, transform_indices = @transform_5, window_bounds = array<i64: 8, 128>}, {pipeline_mode = #tpu.pipeline_mode<synchronous>, transform_indices = @transform_6, window_bounds = array<i64: 1, 128>}, {pipeline_mode = #tpu.pipeline_mode<synchronous>, transform_indices = @transform_7, window_bounds = array<i64: 128, 128>}, {pipeline_mode = #tpu.pipeline_mode<synchronous>, transform_indices = @transform_8, window_bounds = array<i64: 1, 128>}, {pipeline_mode = #tpu.pipeline_mode<synchronous>, transform_indices = @transform_9, window_bounds = array<i64: 128, 128>}, {pipeline_mode = #tpu.pipeline_mode<synchronous>, transform_indices = @transform_10, window_bounds = array<i64: 1, 128>}, {transform_indices = @transform_11, window_bounds = array<i64: 128, 128>}]} {
    %c0 = arith.constant 0 : index
    %c0_0 = arith.constant 0 : index
    %0 = vector.load %arg1[%c0, %c0_0] : memref<128x16xf32, #tpu.memory_space<vmem>>, vector<128x16xf32>
    %c0_1 = arith.constant 0 : index
    %c0_2 = arith.constant 0 : index
    %1 = vector.load %arg2[%c0_1, %c0_2] : memref<128x8xf32, #tpu.memory_space<vmem>>, vector<128x8xf32>
    %2 = arith.truncf %0 : vector<128x16xf32> to vector<128x16xbf16>
    %c0_3 = arith.constant 0 : index
    %c0_4 = arith.constant 0 : index
    %3 = vector.load %arg3[%c0_3, %c0_4] : memref<16x128xbf16, #tpu.memory_space<vmem>>, vector<16x128xbf16>
    %cst = arith.constant dense<0.000000e+00> : vector<128x128xf32>
    %4 = tpu.matmul %2, %3, %cst {dimension_numbers = #tpu.dot_dimension_numbers<[1], [0], [0], [1], [0, 0, 1, 1], [], []>} : vector<128x16xbf16>, vector<16x128xbf16>, vector<128x128xf32> -> vector<128x128xf32>
    %c0_5 = arith.constant 0 : index
    %c0_6 = arith.constant 0 : index
    %5 = vector.load %arg4[%c0_5, %c0_6] : memref<1x128xf32, #tpu.memory_space<vmem>>, vector<1x128xf32>
    %6 = vector.broadcast %5 : vector<1x128xf32> to vector<128x128xf32>
    %7 = arith.addf %4, %6 : vector<128x128xf32>
    %cst_7 = arith.constant 0.000000e+00 : f32
    %8 = vector.broadcast %cst_7 : f32 to vector<128x128xf32>
    %9 = arith.maximumf %7, %8 : vector<128x128xf32>
    %10 = arith.truncf %9 : vector<128x128xf32> to vector<128x128xbf16>
    %c0_8 = arith.constant 0 : index
    %c0_9 = arith.constant 0 : index
    %11 = vector.load %arg5[%c0_8, %c0_9] : memref<128x128xbf16, #tpu.memory_space<vmem>>, vector<128x128xbf16>
    %cst_10 = arith.constant dense<0.000000e+00> : vector<128x128xf32>
    %12 = tpu.matmul %10, %11, %cst_10 {dimension_numbers = #tpu.dot_dimension_numbers<[1], [0], [0], [1], [0, 0, 1, 1], [], []>} : vector<128x128xbf16>, vector<128x128xbf16>, vector<128x128xf32> -> vector<128x128xf32>
    %13 = arith.truncf %1 : vector<128x8xf32> to vector<128x8xbf16>
    %c0_11 = arith.constant 0 : index
    %c0_12 = arith.constant 0 : index
    %14 = vector.load %arg6[%c0_11, %c0_12] : memref<8x128xbf16, #tpu.memory_space<vmem>>, vector<8x128xbf16>
    %cst_13 = arith.constant dense<0.000000e+00> : vector<128x128xf32>
    %15 = tpu.matmul %13, %14, %cst_13 {dimension_numbers = #tpu.dot_dimension_numbers<[1], [0], [0], [1], [0, 0, 1, 1], [], []>} : vector<128x8xbf16>, vector<8x128xbf16>, vector<128x128xf32> -> vector<128x128xf32>
    %16 = arith.addf %12, %15 : vector<128x128xf32>
    %c0_14 = arith.constant 0 : index
    %c0_15 = arith.constant 0 : index
    %17 = vector.load %arg7[%c0_14, %c0_15] : memref<1x128xf32, #tpu.memory_space<vmem>>, vector<1x128xf32>
    %18 = vector.broadcast %17 : vector<1x128xf32> to vector<128x128xf32>
    %19 = arith.addf %16, %18 : vector<128x128xf32>
    %cst_16 = arith.constant 0.000000e+00 : f32
    %20 = vector.broadcast %cst_16 : f32 to vector<128x128xf32>
    %21 = arith.maximumf %19, %20 : vector<128x128xf32>
    %22 = arith.truncf %21 : vector<128x128xf32> to vector<128x128xbf16>
    %c0_17 = arith.constant 0 : index
    %c0_18 = arith.constant 0 : index
    %23 = vector.load %arg8[%c0_17, %c0_18] : memref<128x128xbf16, #tpu.memory_space<vmem>>, vector<128x128xbf16>
    %cst_19 = arith.constant dense<0.000000e+00> : vector<128x128xf32>
    %24 = tpu.matmul %22, %23, %cst_19 {dimension_numbers = #tpu.dot_dimension_numbers<[1], [0], [0], [1], [0, 0, 1, 1], [], []>} : vector<128x128xbf16>, vector<128x128xbf16>, vector<128x128xf32> -> vector<128x128xf32>
    %c0_20 = arith.constant 0 : index
    %c0_21 = arith.constant 0 : index
    %25 = vector.load %arg9[%c0_20, %c0_21] : memref<1x128xf32, #tpu.memory_space<vmem>>, vector<1x128xf32>
    %26 = vector.broadcast %25 : vector<1x128xf32> to vector<128x128xf32>
    %27 = arith.addf %24, %26 : vector<128x128xf32>
    %cst_22 = arith.constant 0.000000e+00 : f32
    %28 = vector.broadcast %cst_22 : f32 to vector<128x128xf32>
    %29 = arith.maximumf %27, %28 : vector<128x128xf32>
    %30 = arith.truncf %29 : vector<128x128xf32> to vector<128x128xbf16>
    %c0_23 = arith.constant 0 : index
    %c0_24 = arith.constant 0 : index
    %31 = vector.load %arg10[%c0_23, %c0_24] : memref<128x128xbf16, #tpu.memory_space<vmem>>, vector<128x128xbf16>
    %cst_25 = arith.constant dense<0.000000e+00> : vector<128x128xf32>
    %32 = tpu.matmul %30, %31, %cst_25 {dimension_numbers = #tpu.dot_dimension_numbers<[1], [0], [0], [1], [0, 0, 1, 1], [], []>} : vector<128x128xbf16>, vector<128x128xbf16>, vector<128x128xf32> -> vector<128x128xf32>
    %c0_26 = arith.constant 0 : index
    %c0_27 = arith.constant 0 : index
    %33 = vector.load %arg11[%c0_26, %c0_27] : memref<1x128xf32, #tpu.memory_space<vmem>>, vector<1x128xf32>
    %34 = vector.broadcast %33 : vector<1x128xf32> to vector<128x128xf32>
    %35 = arith.addf %32, %34 : vector<128x128xf32>
    %c0_28 = arith.constant 0 : index
    %c0_29 = arith.constant 0 : index
    %36 = vector.load %arg12[%c0_28, %c0_29] : memref<128x128xf32, #tpu.memory_space<vmem>>, vector<128x128xf32>
    tpu.vector_store %arg12[%c0_28, %c0_29], %35 {strides = array<i32>} : memref<128x128xf32, #tpu.memory_space<vmem>>, vector<128x128xf32>,
    return
  }
  func.func @transform_0(%arg0: i32) -> (i32, i32) {
    %c0_i32 = arith.constant 0 : i32
    %c0_i32_0 = arith.constant 0 : i32
    return %arg0, %c0_i32 : i32, i32
  }
  func.func @transform_1(%arg0: i32) -> (i32, i32) {
    %c0_i32 = arith.constant 0 : i32
    %c0_i32_0 = arith.constant 0 : i32
    return %arg0, %c0_i32 : i32, i32
  }
  func.func @transform_2(%arg0: i32) -> (i32, i32) {
    %c0_i32 = arith.constant 0 : i32
    %c0_i32_0 = arith.constant 0 : i32
    %c0_i32_1 = arith.constant 0 : i32
    return %c0_i32, %c0_i32_0 : i32, i32
  }
  func.func @transform_3(%arg0: i32) -> (i32, i32) {
    %c0_i32 = arith.constant 0 : i32
    %c0_i32_0 = arith.constant 0 : i32
    %c0_i32_1 = arith.constant 0 : i32
    return %c0_i32, %c0_i32_0 : i32, i32
  }
  func.func @transform_4(%arg0: i32) -> (i32, i32) {
    %c0_i32 = arith.constant 0 : i32
    %c0_i32_0 = arith.constant 0 : i32
    %c0_i32_1 = arith.constant 0 : i32
    return %c0_i32, %c0_i32_0 : i32, i32
  }
  func.func @transform_5(%arg0: i32) -> (i32, i32) {
    %c0_i32 = arith.constant 0 : i32
    %c0_i32_0 = arith.constant 0 : i32
    %c0_i32_1 = arith.constant 0 : i32
    return %c0_i32, %c0_i32_0 : i32, i32
  }
  func.func @transform_6(%arg0: i32) -> (i32, i32) {
    %c0_i32 = arith.constant 0 : i32
    %c0_i32_0 = arith.constant 0 : i32
    %c0_i32_1 = arith.constant 0 : i32
    return %c0_i32, %c0_i32_0 : i32, i32
  }
  func.func @transform_7(%arg0: i32) -> (i32, i32) {
    %c0_i32 = arith.constant 0 : i32
    %c0_i32_0 = arith.constant 0 : i32
    %c0_i32_1 = arith.constant 0 : i32
    return %c0_i32, %c0_i32_0 : i32, i32
  }
  func.func @transform_8(%arg0: i32) -> (i32, i32) {
    %c0_i32 = arith.constant 0 : i32
    %c0_i32_0 = arith.constant 0 : i32
    %c0_i32_1 = arith.constant 0 : i32
    return %c0_i32, %c0_i32_0 : i32, i32
  }
  func.func @transform_9(%arg0: i32) -> (i32, i32) {
    %c0_i32 = arith.constant 0 : i32
    %c0_i32_0 = arith.constant 0 : i32
    %c0_i32_1 = arith.constant 0 : i32
    return %c0_i32, %c0_i32_0 : i32, i32
  }
  func.func @transform_10(%arg0: i32) -> (i32, i32) {
    %c0_i32 = arith.constant 0 : i32
    %c0_i32_0 = arith.constant 0 : i32
    %c0_i32_1 = arith.constant 0 : i32
    return %c0_i32, %c0_i32_0 : i32, i32
  }
  func.func @transform_11(%arg0: i32) -> (i32, i32) {
    %c0_i32 = arith.constant 0 : i32
    %c0_i32_0 = arith.constant 0 : i32
    return %arg0, %c0_i32 : i32, i32
  }
}

</mosaic_0001>

<llo_original>
// kernel: critic_forward.1
$region0: #{critic_forward.1}
  #allocation0 [shape = 'u32[]', space=smem, size = 0x4, offset = 0x4, fixed_abs, tag = 'smem constant byte address 0x4 - core index']
  #allocation1 [shape = 'u32[72,128]{1,0:T(1,128)}', space=vmem, size = 0x9000, scoped, tag = 'internal scratch']
  %s0 = inlined_call_operand.vmem [shape: f32[256,16], index: 0, kind: input, shape index: {}]
  %s1 = inlined_call_operand.vmem [shape: f32[256,8], index: 1, kind: input, shape index: {}]
  %s2 = inlined_call_operand.vmem [shape: bf16[16,128], index: 2, kind: input, shape index: {}]
  %s3 = inlined_call_operand.vmem [shape: f32[1,128], index: 3, kind: input, shape index: {}]
  %s4 = inlined_call_operand.vmem [shape: bf16[128,128], index: 4, kind: input, shape index: {}]
  %s5 = inlined_call_operand.vmem [shape: bf16[8,128], index: 5, kind: input, shape index: {}]
  %s6 = inlined_call_operand.vmem [shape: f32[1,128], index: 6, kind: input, shape index: {}]
  %s7 = inlined_call_operand.vmem [shape: bf16[128,128], index: 7, kind: input, shape index: {}]
  %s8 = inlined_call_operand.vmem [shape: f32[1,128], index: 8, kind: input, shape index: {}]
  %s9 = inlined_call_operand.vmem [shape: bf16[128,128], index: 9, kind: input, shape index: {}]
  %s10 = inlined_call_operand.vmem [shape: f32[1,128], index: 10, kind: input, shape index: {}]
  %s11 = inlined_call_operand.vmem [shape: f32[256,128], index: 11, kind: output, shape index: {}]
  %s12 = sld [smem:[#allocation0]]
  $region77: #{critic_forward.1} parent=0
    _
  %s14 = ssub.s32 1, %s12
  %s15 = scalar_select 0, %s14, %s12
  loop: start=0, step=1, limit=4
  $region2: #{critic_forward.1} parent=0 // loop_pre_header
    _
  $region3: #{critic_forward.1} parent=0 // loop_header
    %s17 = sphi 0, %s21
    %p18 = scmp.ge.s32.totalorder %s17, 4
    %s27 = sphi 0, %s29
    %s30 = sphi 0, %s27
    %s31 = sphi 0, %s30
    %s47 = sphi 0, %s31
    %s53 = sphi 0, %s55
    %s56 = sphi 0, %s53
    %s57 = sphi 0, %s56
    %s73 = sphi 0, %s57
    %s77 = sphi 0, %s77
    %s79 = sphi 0, %s77
    %s80 = sphi 0, %s79
    %s94 = sphi 0, %s80
    %s98 = sphi 0, %s98
    %s100 = sphi 0, %s98
    %s101 = sphi 0, %s100
    %s115 = sphi 0, %s101
    %s119 = sphi 0, %s119
    %s121 = sphi 0, %s119
    %s122 = sphi 0, %s121
    %s136 = sphi 0, %s122
    %s140 = sphi 0, %s140
    %s142 = sphi 0, %s140
    %s143 = sphi 0, %s142
    %s157 = sphi 0, %s143
    %s161 = sphi 0, %s161
    %s163 = sphi 0, %s161
    %s164 = sphi 0, %s163
    %s178 = sphi 0, %s164
    %s182 = sphi 0, %s182
    %s184 = sphi 0, %s182
    %s185 = sphi 0, %s184
    %s199 = sphi 0, %s185
    %s203 = sphi 0, %s203
    %s205 = sphi 0, %s203
    %s206 = sphi 0, %s205
    %s220 = sphi 0, %s206
    %s224 = sphi 0, %s224
    %s226 = sphi 0, %s224
    %s227 = sphi 0, %s226
    %s241 = sphi 0, %s227
    %s245 = sphi 0, %s245
    %s247 = sphi 0, %s245
    %s248 = sphi 0, %s247
    %s262 = sphi 0, %s248
    %s268 = sphi 0, %s270
    %s271 = sphi 0, %s268
    %s272 = sphi 0, %s271
    %s288 = sphi 0, %s272
  $region4: #{critic_forward.1} parent=0 // loop_header_branch
    %20 = sbr.rel (%p18) target = $region8
  $region5: #{critic_forward.1} parent=0 // loop_body
    %s22 = ssub.s32 %s17, 1
    %s23 = ssub.s32 %s17, 2
    %s24 = sadd.s32 %s17, 1
    %s25 = ssub.s32 %s17, %s24
    %p26 = scmp.eq.s32.totalorder %s25, 0
    %s28 = sadd.s32 %s27, 1
    %s29 = scalar_select %p26, %s27, %s28
    %p32 = pneg %p26
    %p33 = scmp.eq.s32.totalorder %s17, 1
    %p34 = por %p32, %p33
    %p35 = scmp.ne.s32.totalorder %s27, %s30
    %p36 = scmp.eq.s32.totalorder %s17, 0
    %p37 = por %p35, %p36
    %p38 = scmp.ne.s32.totalorder %s27, %s30
    %p39 = scmp.eq.s32.totalorder %s22, 1
    %p40 = por %p38, %p39
    %p41 = scmp.ne.s32.totalorder %s30, %s31
    %p42 = scmp.eq.s32.totalorder %s22, 0
    %p43 = por %p41, %p42
    %p44 = scmp.ne.s32.totalorder %s30, %s31
    %p45 = scmp.eq.s32.totalorder %s23, 1
    %p46 = por %p44, %p45
    %p48 = scmp.ne.s32.totalorder %s31, %s47
    %p49 = scmp.eq.s32.totalorder %s23, 0
    %p50 = por %p48, %p49
    %s51 = ssub.s32 %s17, %s24
    %p52 = scmp.eq.s32.totalorder %s51, 0
    %s54 = sadd.s32 %s53, 1
    %s55 = scalar_select %p52, %s53, %s54
    %p58 = pneg %p52
    %p59 = scmp.eq.s32.totalorder %s17, 1
    %p60 = por %p58, %p59
    %p61 = scmp.ne.s32.totalorder %s53, %s56
    %p62 = scmp.eq.s32.totalorder %s17, 0
    %p63 = por %p61, %p62
    %p64 = scmp.ne.s32.totalorder %s53, %s56
    %p65 = scmp.eq.s32.totalorder %s22, 1
    %p66 = por %p64, %p65
    %p67 = scmp.ne.s32.totalorder %s56, %s57
    %p68 = scmp.eq.s32.totalorder %s22, 0
    %p69 = por %p67, %p68
    %p70 = scmp.ne.s32.totalorder %s56, %s57
    %p71 = scmp.eq.s32.totalorder %s23, 1
    %p72 = por %p70, %p71
    %p74 = scmp.ne.s32.totalorder %s57, %s73
    %p75 = scmp.eq.s32.totalorder %s23, 0
    %p76 = por %p74, %p75
    %s78 = sadd.s32 %s77, 1
    %p81 = scmp.eq.s32.totalorder %s17, 1
    %p82 = scmp.ne.s32.totalorder %s77, %s79
    %p83 = scmp.eq.s32.totalorder %s17, 0
    %p84 = por %p82, %p83
    %p85 = scmp.ne.s32.totalorder %s77, %s79
    %p86 = scmp.eq.s32.totalorder %s22, 1
    %p87 = por %p85, %p86
    %p88 = scmp.ne.s32.totalorder %s79, %s80
    %p89 = scmp.eq.s32.totalorder %s22, 0
    %p90 = por %p88, %p89
    %p91 = scmp.ne.s32.totalorder %s79, %s80
    %p92 = scmp.eq.s32.totalorder %s23, 1
    %p93 = por %p91, %p92
    %p95 = scmp.ne.s32.totalorder %s80, %s94
    %p96 = scmp.eq.s32.totalorder %s23, 0
    %p97 = por %p95, %p96
    %s99 = sadd.s32 %s98, 1
    %p102 = scmp.eq.s32.totalorder %s17, 1
    %p103 = scmp.ne.s32.totalorder %s98, %s100
    %p104 = scmp.eq.s32.totalorder %s17, 0
    %p105 = por %p103, %p104
    %p106 = scmp.ne.s32.totalorder %s98, %s100
    %p107 = scmp.eq.s32.totalorder %s22, 1
    %p108 = por %p106, %p107
    %p109 = scmp.ne.s32.totalorder %s100, %s101
    %p110 = scmp.eq.s32.totalorder %s22, 0
    %p111 = por %p109, %p110
    %p112 = scmp.ne.s32.totalorder %s100, %s101
    %p113 = scmp.eq.s32.totalorder %s23, 1
    %p114 = por %p112, %p113
    %p116 = scmp.ne.s32.totalorder %s101, %s115
    %p117 = scmp.eq.s32.totalorder %s23, 0
    %p118 = por %p116, %p117
    %s120 = sadd.s32 %s119, 1
    %p123 = scmp.eq.s32.totalorder %s17, 1
    %p124 = scmp.ne.s32.totalorder %s119, %s121
    %p125 = scmp.eq.s32.totalorder %s17, 0
    %p126 = por %p124, %p125
    %p127 = scmp.ne.s32.totalorder %s119, %s121
    %p128 = scmp.eq.s32.totalorder %s22, 1
    %p129 = por %p127, %p128
    %p130 = scmp.ne.s32.totalorder %s121, %s122
    %p131 = scmp.eq.s32.totalorder %s22, 0
    %p132 = por %p130, %p131
    %p133 = scmp.ne.s32.totalorder %s121, %s122
    %p134 = scmp.eq.s32.totalorder %s23, 1
    %p135 = por %p133, %p134
    %p137 = scmp.ne.s32.totalorder %s122, %s136
    %p138 = scmp.eq.s32.totalorder %s23, 0
    %p139 = por %p137, %p138
    %s141 = sadd.s32 %s140, 1
    %p144 = scmp.eq.s32.totalorder %s17, 1
    %p145 = scmp.ne.s32.totalorder %s140, %s142
    %p146 = scmp.eq.s32.totalorder %s17, 0
    %p147 = por %p145, %p146
    %p148 = scmp.ne.s32.totalorder %s140, %s142
    %p149 = scmp.eq.s32.totalorder %s22, 1
    %p150 = por %p148, %p149
    %p151 = scmp.ne.s32.totalorder %s142, %s143
    %p152 = scmp.eq.s32.totalorder %s22, 0
    %p153 = por %p151, %p152
    %p154 = scmp.ne.s32.totalorder %s142, %s143
    %p155 = scmp.eq.s32.totalorder %s23, 1
    %p156 = por %p154, %p155
    %p158 = scmp.ne.s32.totalorder %s143, %s157
    %p159 = scmp.eq.s32.totalorder %s23, 0
    %p160 = por %p158, %p159
    %s162 = sadd.s32 %s161, 1
    %p165 = scmp.eq.s32.totalorder %s17, 1
    %p166 = scmp.ne.s32.totalorder %s161, %s163
    %p167 = scmp.eq.s32.totalorder %s17, 0
    %p168 = por %p166, %p167
    %p169 = scmp.ne.s32.totalorder %s161, %s163
    %p170 = scmp.eq.s32.totalorder %s22, 1
    %p171 = por %p169, %p170
    %p172 = scmp.ne.s32.totalorder %s163, %s164
    %p173 = scmp.eq.s32.totalorder %s22, 0
    %p174 = por %p172, %p173
    %p175 = scmp.ne.s32.totalorder %s163, %s164
    %p176 = scmp.eq.s32.totalorder %s23, 1
    %p177 = por %p175, %p176
    %p179 = scmp.ne.s32.totalorder %s164, %s178
    %p180 = scmp.eq.s32.totalorder %s23, 0
    %p181 = por %p179, %p180
    %s183 = sadd.s32 %s182, 1
    %p186 = scmp.eq.s32.totalorder %s17, 1
    %p187 = scmp.ne.s32.totalorder %s182, %s184
    %p188 = scmp.eq.s32.totalorder %s17, 0
    %p189 = por %p187, %p188
    %p190 = scmp.ne.s32.totalorder %s182, %s184
    %p191 = scmp.eq.s32.totalorder %s22, 1
    %p192 = por %p190, %p191
    %p193 = scmp.ne.s32.totalorder %s184, %s185
    %p194 = scmp.eq.s32.totalorder %s22, 0
    %p195 = por %p193, %p194
    %p196 = scmp.ne.s32.totalorder %s184, %s185
    %p197 = scmp.eq.s32.totalorder %s23, 1
    %p198 = por %p196, %p197
    %p200 = scmp.ne.s32.totalorder %s185, %s199
    %p201 = scmp.eq.s32.totalorder %s23, 0
    %p202 = por %p200, %p201
    %s204 = sadd.s32 %s203, 1
    %p207 = scmp.eq.s32.totalorder %s17, 1
    %p208 = scmp.ne.s32.totalorder %s203, %s205
    %p209 = scmp.eq.s32.totalorder %s17, 0
    %p210 = por %p208, %p209
    %p211 = scmp.ne.s32.totalorder %s203, %s205
    %p212 = scmp.eq.s32.totalorder %s22, 1
    %p213 = por %p211, %p212
    %p214 = scmp.ne.s32.totalorder %s205, %s206
    %p215 = scmp.eq.s32.totalorder %s22, 0
    %p216 = por %p214, %p215
    %p217 = scmp.ne.s32.totalorder %s205, %s206
    %p218 = scmp.eq.s32.totalorder %s23, 1
    %p219 = por %p217, %p218
    %p221 = scmp.ne.s32.totalorder %s206, %s220
    %p222 = scmp.eq.s32.totalorder %s23, 0
    %p223 = por %p221, %p222
    %s225 = sadd.s32 %s224, 1
    %p228 = scmp.eq.s32.totalorder %s17, 1
    %p229 = scmp.ne.s32.totalorder %s224, %s226
    %p230 = scmp.eq.s32.totalorder %s17, 0
    %p231 = por %p229, %p230
    %p232 = scmp.ne.s32.totalorder %s224, %s226
    %p233 = scmp.eq.s32.totalorder %s22, 1
    %p234 = por %p232, %p233
    %p235 = scmp.ne.s32.totalorder %s226, %s227
    %p236 = scmp.eq.s32.totalorder %s22, 0
    %p237 = por %p235, %p236
    %p238 = scmp.ne.s32.totalorder %s226, %s227
    %p239 = scmp.eq.s32.totalorder %s23, 1
    %p240 = por %p238, %p239
    %p242 = scmp.ne.s32.totalorder %s227, %s241
    %p243 = scmp.eq.s32.totalorder %s23, 0
    %p244 = por %p242, %p243
    %s246 = sadd.s32 %s245, 1
    %p249 = scmp.eq.s32.totalorder %s17, 1
    %p250 = scmp.ne.s32.totalorder %s245, %s247
    %p251 = scmp.eq.s32.totalorder %s17, 0
    %p252 = por %p250, %p251
    %p253 = scmp.ne.s32.totalorder %s245, %s247
    %p254 = scmp.eq.s32.totalorder %s22, 1
    %p255 = por %p253, %p254
    %p256 = scmp.ne.s32.totalorder %s247, %s248
    %p257 = scmp.eq.s32.totalorder %s22, 0
    %p258 = por %p256, %p257
    %p259 = scmp.ne.s32.totalorder %s247, %s248
    %p260 = scmp.eq.s32.totalorder %s23, 1
    %p261 = por %p259, %p260
    %p263 = scmp.ne.s32.totalorder %s248, %s262
    %p264 = scmp.eq.s32.totalorder %s23, 0
    %p265 = por %p263, %p264
    %s266 = ssub.s32 %s17, %s24
    %p267 = scmp.eq.s32.totalorder %s266, 0
    %s269 = sadd.s32 %s268, 1
    %s270 = scalar_select %p267, %s268, %s269
    %p273 = pneg %p267
    %p274 = scmp.eq.s32.totalorder %s17, 1
    %p275 = por %p273, %p274
    %p276 = scmp.ne.s32.totalorder %s268, %s271
    %p277 = scmp.eq.s32.totalorder %s17, 0
    %p278 = por %p276, %p277
    %p279 = scmp.ne.s32.totalorder %s268, %s271
    %p280 = scmp.eq.s32.totalorder %s22, 1
    %p281 = por %p279, %p280
    %p282 = scmp.ne.s32.totalorder %s271, %s272
    %p283 = scmp.eq.s32.totalorder %s22, 0
    %p284 = por %p282, %p283
    %p285 = scmp.ne.s32.totalorder %s271, %s272
    %p286 = scmp.eq.s32.totalorder %s23, 1
    %p287 = por %p285, %p286
    %p289 = scmp.ne.s32.totalorder %s272, %s288
    %p290 = scmp.eq.s32.totalorder %s23, 0
    %p291 = por %p289, %p290
    %p292 = scmp.le.s32.totalorder 1, %s17
    %p293 = scmp.lt.s32.totalorder %s17, 3
    %p294 = pnand %p292, %p293
    %p295 = pneg %p294
    // Predicated region
    $region9: #{critic_forward.1} parent=5 // pred_check
      _
    $region10: #{critic_forward.1} parent=5 // pred_check_branch
      %297 = sbr.rel (%p294) target = $region12
    $region11: #{critic_forward.1} parent=5 // pred_region
      %s298 = ssub.s32 %s17, 1
      // Predicated region
      $region13: #{critic_forward.1} parent=11 // pred_check
        %p299 = pneg %p90
      $region14: #{critic_forward.1} parent=11 // pred_check_branch
        %301 = sbr.rel (%p299) target = $region16
      $region15: #{critic_forward.1} parent=11 // pred_region
        _
      $region16: #{critic_forward.1} parent=11 // pred_fallthru
        _
      // Predicated region
      $region17: #{critic_forward.1} parent=11 // pred_check
        %p302 = pneg %p111
      $region18: #{critic_forward.1} parent=11 // pred_check_branch
        %304 = sbr.rel (%p302) target = $region20
      $region19: #{critic_forward.1} parent=11 // pred_region
        _
      $region20: #{critic_forward.1} parent=11 // pred_fallthru
        _
      // Predicated region
      $region21: #{critic_forward.1} parent=11 // pred_check
        %p305 = pneg %p132
      $region22: #{critic_forward.1} parent=11 // pred_check_branch
        %307 = sbr.rel (%p305) target = $region24
      $region23: #{critic_forward.1} parent=11 // pred_region
        _
      $region24: #{critic_forward.1} parent=11 // pred_fallthru
        _
      // Predicated region
      $region25: #{critic_forward.1} parent=11 // pred_check
        %p308 = pneg %p153
      $region26: #{critic_forward.1} parent=11 // pred_check_branch
        %310 = sbr.rel (%p308) target = $region28
      $region27: #{critic_forward.1} parent=11 // pred_region
        _
      $region28: #{critic_forward.1} parent=11 // pred_fallthru
        _
      // Predicated region
      $region29: #{critic_forward.1} parent=11 // pred_check
        %p311 = pneg %p174
      $region30: #{critic_forward.1} parent=11 // pred_check_branch
        %313 = sbr.rel (%p311) target = $region32
      $region31: #{critic_forward.1} parent=11 // pred_region
        _
      $region32: #{critic_forward.1} parent=11 // pred_fallthru
        _
      // Predicated region
      $region33: #{critic_forward.1} parent=11 // pred_check
        %p314 = pneg %p195
      $region34: #{critic_forward.1} parent=11 // pred_check_branch
        %316 = sbr.rel (%p314) target = $region36
      $region35: #{critic_forward.1} parent=11 // pred_region
        _
      $region36: #{critic_forward.1} parent=11 // pred_fallthru
        _
      // Predicated region
      $region37: #{critic_forward.1} parent=11 // pred_check
        %p317 = pneg %p216
      $region38: #{critic_forward.1} parent=11 // pred_check_branch
        %319 = sbr.rel (%p317) target = $region40
      $region39: #{critic_forward.1} parent=11 // pred_region
        _
      $region40: #{critic_forward.1} parent=11 // pred_fallthru
        _
      // Predicated region
      $region41: #{critic_forward.1} parent=11 // pred_check
        %p320 = pneg %p237
      $region42: #{critic_forward.1} parent=11 // pred_check_branch
        %322 = sbr.rel (%p320) target = $region44
      $region43: #{critic_forward.1} parent=11 // pred_region
        _
      $region44: #{critic_forward.1} parent=11 // pred_fallthru
        _
      // Predicated region
      $region45: #{critic_forward.1} parent=11 // pred_check
        %p323 = pneg %p258
      $region46: #{critic_forward.1} parent=11 // pred_check_branch
        %325 = sbr.rel (%p323) target = $region48
      $region47: #{critic_forward.1} parent=11 // pred_region
        _
      $region48: #{critic_forward.1} parent=11 // pred_fallthru
        _
    $region12: #{critic_forward.1} parent=5 // pred_fallthru
      _
    %p326 = scmp.lt.s32.totalorder %s17, 2
    // Predicated region
    $region49: #{critic_forward.1} parent=5 // pred_check
      %p327 = pneg %p326
    $region50: #{critic_forward.1} parent=5 // pred_check_branch
      %329 = sbr.rel (%p327) target = $region52
    $region51: #{critic_forward.1} parent=5 // pred_region
      // Predicated region
      $region53: #{critic_forward.1} parent=51 // pred_check
        %p330 = pneg %p37
      $region54: #{critic_forward.1} parent=51 // pred_check_branch
        %332 = sbr.rel (%p330) target = $region56
      $region55: #{critic_forward.1} parent=51 // pred_region
        %s333 = smul.u32 16, %s17
        %p334 = scmp.lt.s32.totalorder %s333, 31
        %s335 = scalar_select %p334, %s333, 31
        %s336 = smul.addr %s335, 8
        %s337 = scalar_lea.vmem %s0, %s336
        %s338 = smul.u32 16, %s17
      $region56: #{critic_forward.1} parent=51 // pred_fallthru
        _
      // Predicated region
      $region57: #{critic_forward.1} parent=51 // pred_check
        %p339 = pneg %p63
      $region58: #{critic_forward.1} parent=51 // pred_check_branch
        %341 = sbr.rel (%p339) target = $region60
      $region59: #{critic_forward.1} parent=51 // pred_region
        %s342 = smul.u32 16, %s17
        %p343 = scmp.lt.s32.totalorder %s342, 31
        %s344 = scalar_select %p343, %s342, 31
        %s345 = smul.addr %s344, 8
        %s346 = scalar_lea.vmem %s1, %s345
        %s347 = smul.u32 16, %s17
      $region60: #{critic_forward.1} parent=51 // pred_fallthru
        _
    $region52: #{critic_forward.1} parent=5 // pred_fallthru
      _
    %p348 = scmp.le.s32.totalorder 1, %s17
    %p349 = scmp.lt.s32.totalorder %s17, 3
    %p350 = pnand %p348, %p349
    %p351 = pneg %p350
    // Predicated region
    $region61: #{critic_forward.1} parent=5 // pred_check
      _
    $region62: #{critic_forward.1} parent=5 // pred_check_branch
      %353 = sbr.rel (%p350) target = $region64
    $region63: #{critic_forward.1} parent=5 // pred_region
      %s354 = ssub.s32 %s17, 1
      %s355 = smul.u32 16, %s22
      %p356 = scmp.lt.s32.totalorder %s355, 31
      %s357 = scalar_select %p356, %s355, 31
      %s358 = smul.addr %s357, 8
      %s359 = scalar_lea.vmem %s0, %s358
      %p360 = pneg %p43
      %p361 = pneg %p40
      %s362 = smul.u32 16, %s22
      %p363 = scmp.lt.s32.totalorder %s362, 31
      %s364 = scalar_select %p363, %s362, 31
      %s365 = smul.addr %s364, 8
      %s366 = scalar_lea.vmem %s1, %s365
      %p367 = pneg %p69
      %p368 = pneg %p66
      %p369 = pneg %p90
      %p370 = pneg %p87
      %p371 = pneg %p111
      %p372 = pneg %p108
      %p373 = pneg %p132
      %p374 = pneg %p129
      %p375 = pneg %p153
      %p376 = pneg %p150
      %p377 = pneg %p174
      %p378 = pneg %p171
      %p379 = pneg %p195
      %p380 = pneg %p192
      %p381 = pneg %p216
      %p382 = pneg %p213
      %p383 = pneg %p237
      %p384 = pneg %p234
      %p385 = pneg %p258
      %p386 = pneg %p255
      %p387 = pneg %p284
      %p388 = pneg %p281
      %s389 = smul.u32 16, %s22
      %p390 = scmp.lt.s32.totalorder %s389, 31
      %s391 = scalar_select %p390, %s389, 31
      %s392 = smul.addr %s391, 8
      %s393 = scalar_lea.vmem %s11, %s392
      %s394 = smul.u32 16, %s22
      %p395 = scmp.lt.s32.totalorder %s394, 31
      %s396 = scalar_select %p395, %s394, 31
      %s397 = smul.addr %s396, 8
      %s398 = scalar_lea.vmem %s0, %s397
      %s399 = smul.u32 16, %s22
      %s400 = smul.u32 16, %s22
      %p401 = scmp.lt.s32.totalorder %s400, 31
      %s402 = scalar_select %p401, %s400, 31
      %s403 = smul.addr %s402, 8
      %s404 = scalar_lea.vmem %s1, %s403
      %s405 = smul.u32 16, %s22
      %s406 = smul.u32 16, %s22
      %p407 = scmp.lt.s32.totalorder %s406, 31
      %s408 = scalar_select %p407, %s406, 31
      %s409 = smul.addr %s408, 8
      %s410 = scalar_lea.vmem %s11, %s409
      %s411 = smul.u32 16, %s22
      %v413 = vld [vmem:[%s398] sm:$0xff]
      %v414 = vld [vmem:[%s398 + $0x8] sm:$0xff]
      %v415 = vld [vmem:[%s398 + $0x10] sm:$0xff]
      %v416 = vld [vmem:[%s398 + $0x18] sm:$0xff]
      %v417 = vld [vmem:[%s398 + $0x20] sm:$0xff]
      %v418 = vld [vmem:[%s398 + $0x28] sm:$0xff]
      %v419 = vld [vmem:[%s398 + $0x30] sm:$0xff]
      %v420 = vld [vmem:[%s398 + $0x38] sm:$0xff]
      %v421 = vld [vmem:[%s398 + $0x40] sm:$0xff]
      %v422 = vld [vmem:[%s398 + $0x48] sm:$0xff]
      %v423 = vld [vmem:[%s398 + $0x50] sm:$0xff]
      %v424 = vld [vmem:[%s398 + $0x58] sm:$0xff]
      %v425 = vld [vmem:[%s398 + $0x60] sm:$0xff]
      %v426 = vld [vmem:[%s398 + $0x68] sm:$0xff]
      %v427 = vld [vmem:[%s398 + $0x70] sm:$0xff]
      %v428 = vld [vmem:[%s398 + $0x78] sm:$0xff]
      %v429 = vld [vmem:[%s404] sm:$0xff]
      %v430 = vld [vmem:[%s404 + $0x8] sm:$0xff]
      %v431 = vld [vmem:[%s404 + $0x10] sm:$0xff]
      %v432 = vld [vmem:[%s404 + $0x18] sm:$0xff]
      %v433 = vld [vmem:[%s404 + $0x20] sm:$0xff]
      %v434 = vld [vmem:[%s404 + $0x28] sm:$0xff]
      %v435 = vld [vmem:[%s404 + $0x30] sm:$0xff]
      %v436 = vld [vmem:[%s404 + $0x38] sm:$0xff]
      %v437 = vld [vmem:[%s404 + $0x40] sm:$0xff]
      %v438 = vld [vmem:[%s404 + $0x48] sm:$0xff]
      %v439 = vld [vmem:[%s404 + $0x50] sm:$0xff]
      %v440 = vld [vmem:[%s404 + $0x58] sm:$0xff]
      %v441 = vld [vmem:[%s404 + $0x60] sm:$0xff]
      %v442 = vld [vmem:[%s404 + $0x68] sm:$0xff]
      %v443 = vld [vmem:[%s404 + $0x70] sm:$0xff]
      %v444 = vld [vmem:[%s404 + $0x78] sm:$0xff]
      %v445 = vpack.c.bf16 %v414, %v413
      %v446 = vpack.c.bf16 %v416, %v415
      %v447 = vpack.c.bf16 %v418, %v417
      %v448 = vpack.c.bf16 %v420, %v419
      %v449 = vpack.c.bf16 %v422, %v421
      %v450 = vpack.c.bf16 %v424, %v423
      %v451 = vpack.c.bf16 %v426, %v425
      %v452 = vpack.c.bf16 %v428, %v427
      %v453 = vld [vmem:[%s2] sm:$0xf]
      %v454 = vld [vmem:[%s2 + $0x4] sm:$0xf]
      %v455 = vld [vmem:[%s3] sm:$0x1]
      %v457 = vperm.slane %v455, 0
      %v461 = vunpack.c.l.b16 %v453
      %v462 = vunpack.c.l.b16 %v454
      %v463 = vpack.c.b16 %v462, %v461
      %vm465 = vcmask 130048
      %v467 = vsel %vm465, %v445, 0
      %v470 = vsel %vm465, %v446, 0
      %v473 = vsel %vm465, %v447, 0
      %v476 = vsel %vm465, %v448, 0
      %v479 = vsel %vm465, %v449, 0
      %v482 = vsel %vm465, %v450, 0
      %v485 = vsel %vm465, %v451, 0
      %v488 = vsel %vm465, %v452, 0
      %490 = vmatpush.bf16.msra.mxu0 0
      %491 = vmatpush.bf16.msra.mxu0 0
      %492 = vmatpush.bf16.msra.mxu0 0
      %493 = vmatpush.bf16.msra.mxu0 0
      %494 = vmatpush.bf16.msra.mxu0 0
      %495 = vmatpush.bf16.msra.mxu0 0
      %496 = vmatpush.bf16.msra.mxu0 0
      %497 = vmatpush.bf16.msra.mxu0 %v463
      %498 = vmatmul.bf16.gmra.mxu0 %v467
      %v499 = vpop.f32.mrf.mxu0
      %v500 = vadd.f32 %v457, %v499
      %v501 = vpop.f32.mrf.mxu0
      %v502 = vadd.f32 %v457, %v501
      %503 = vmatmul.bf16.gmra.mxu0 %v470
      %v504 = vpop.f32.mrf.mxu0
      %v505 = vadd.f32 %v457, %v504
      %v506 = vpop.f32.mrf.mxu0
      %v507 = vadd.f32 %v457, %v506
      %508 = vmatmul.bf16.gmra.mxu0 %v473
      %v509 = vpop.f32.mrf.mxu0
      %v510 = vadd.f32 %v457, %v509
      %v511 = vpop.f32.mrf.mxu0
      %v512 = vadd.f32 %v457, %v511
      %513 = vmatmul.bf16.gmra.mxu0 %v476
      %v514 = vpop.f32.mrf.mxu0
      %v515 = vadd.f32 %v457, %v514
      %v516 = vpop.f32.mrf.mxu0
      %v517 = vadd.f32 %v457, %v516
      %518 = vmatmul.bf16.gmra.mxu0 %v479
      %v519 = vpop.f32.mrf.mxu0
      %v520 = vadd.f32 %v457, %v519
      %v521 = vpop.f32.mrf.mxu0
      %v522 = vadd.f32 %v457, %v521
      %523 = vmatmul.bf16.gmra.mxu0 %v482
      %v524 = vpop.f32.mrf.mxu0
      %v525 = vadd.f32 %v457, %v524
      %v526 = vpop.f32.mrf.mxu0
      %v527 = vadd.f32 %v457, %v526
      %528 = vmatmul.bf16.gmra.mxu0 %v485
      %v529 = vpop.f32.mrf.mxu0
      %v530 = vadd.f32 %v457, %v529
      %v531 = vpop.f32.mrf.mxu0
      %v532 = vadd.f32 %v457, %v531
      %533 = vmatmul.bf16.gmra.mxu0 %v488
      %v534 = vpop.f32.mrf.mxu0
      %v535 = vadd.f32 %v457, %v534
      %v536 = vpop.f32.mrf.mxu0
      %v537 = vadd.f32 %v457, %v536
      %538 = vdwg.mxu0
      %v539 = vmax.f32 %v500, 0.0
      %v540 = vmax.f32 %v502, 0.0
      %v541 = vmax.f32 %v505, 0.0
      %v542 = vmax.f32 %v507, 0.0
      %v543 = vmax.f32 %v510, 0.0
      %v544 = vmax.f32 %v512, 0.0
      %v545 = vmax.f32 %v515, 0.0
      %v546 = vmax.f32 %v517, 0.0
      %v547 = vmax.f32 %v520, 0.0
      %v548 = vmax.f32 %v522, 0.0
      %v549 = vmax.f32 %v525, 0.0
      %v550 = vmax.f32 %v527, 0.0
      %v551 = vmax.f32 %v530, 0.0
      %v552 = vmax.f32 %v532, 0.0
      %v553 = vmax.f32 %v535, 0.0
      %v554 = vmax.f32 %v537, 0.0
      %v555 = vpack.c.bf16 %v540, %v539
      %v556 = vpack.c.bf16 %v542, %v541
      %v557 = vpack.c.bf16 %v544, %v543
      %v558 = vpack.c.bf16 %v546, %v545
      %v559 = vpack.c.bf16 %v548, %v547
      %v560 = vpack.c.bf16 %v550, %v549
      %v561 = vpack.c.bf16 %v552, %v551
      %v562 = vpack.c.bf16 %v554, %v553
      %v563 = vld [vmem:[%s4] sm:$0xf]
      %v564 = vld [vmem:[%s4 + $0x4] sm:$0xf]
      %v565 = vld [vmem:[%s4 + $0x8] sm:$0xf]
      %v566 = vld [vmem:[%s4 + $0xc] sm:$0xf]
      %v567 = vld [vmem:[%s4 + $0x10] sm:$0xf]
      %v568 = vld [vmem:[%s4 + $0x14] sm:$0xf]
      %v569 = vld [vmem:[%s4 + $0x18] sm:$0xf]
      %v570 = vld [vmem:[%s4 + $0x1c] sm:$0xf]
      %v571 = vld [vmem:[%s4 + $0x20] sm:$0xf]
      %v572 = vld [vmem:[%s4 + $0x24] sm:$0xf]
      %v573 = vld [vmem:[%s4 + $0x28] sm:$0xf]
      %v574 = vld [vmem:[%s4 + $0x2c] sm:$0xf]
      %v575 = vld [vmem:[%s4 + $0x30] sm:$0xf]
      %v576 = vld [vmem:[%s4 + $0x34] sm:$0xf]
      %v577 = vld [vmem:[%s4 + $0x38] sm:$0xf]
      %v578 = vld [vmem:[%s4 + $0x3c] sm:$0xf]
      %v579 = vpack.c.bf16 %v430, %v429
      %v580 = vpack.c.bf16 %v432, %v431
      %v581 = vpack.c.bf16 %v434, %v433
      %v582 = vpack.c.bf16 %v436, %v435
      %v583 = vpack.c.bf16 %v438, %v437
      %v584 = vpack.c.bf16 %v440, %v439
      %v585 = vpack.c.bf16 %v442, %v441
      %v586 = vpack.c.bf16 %v444, %v443
      %v587 = vld [vmem:[%s5] sm:$0xf]
      %vm588 = vcmask 64512
      %v590 = vsel %vm588, %v579, 0
      %v593 = vsel %vm588, %v580, 0
      %v596 = vsel %vm588, %v581, 0
      %v599 = vsel %vm588, %v582, 0
      %v602 = vsel %vm588, %v583, 0
      %v605 = vsel %vm588, %v584, 0
      %v608 = vsel %vm588, %v585, 0
      %v611 = vsel %vm588, %v586, 0
      %vm613 = vcmask 1043456
      %v615 = vsel %vm613, %v587, 0
      %617 = vmatpush.bf16.msra.mxu0 0
      %618 = vmatpush.bf16.msra.mxu0 0
      %619 = vmatpush.bf16.msra.mxu0 0
      %620 = vmatpush.bf16.msra.mxu0 0
      %621 = vmatpush.bf16.msra.mxu0 0
      %622 = vmatpush.bf16.msra.mxu0 0
      %623 = vmatpush.bf16.msra.mxu0 0
      %624 = vmatpush.bf16.msra.mxu0 %v615
      %625 = vmatmul.bf16.gmra.mxu0 %v590
      %v626 = vpop.f32.mrf.mxu0
      %v627 = vadd.f32 0.0, %v626
      %v628 = vpop.f32.mrf.mxu0
      %v629 = vadd.f32 0.0, %v628
      %630 = vmatmul.bf16.gmra.mxu0 %v593
      %v631 = vpop.f32.mrf.mxu0
      %v632 = vadd.f32 0.0, %v631
      %v633 = vpop.f32.mrf.mxu0
      %v634 = vadd.f32 0.0, %v633
      %635 = vmatmul.bf16.gmra.mxu0 %v596
      %v636 = vpop.f32.mrf.mxu0
      %v637 = vadd.f32 0.0, %v636
      %v638 = vpop.f32.mrf.mxu0
      %v639 = vadd.f32 0.0, %v638
      %640 = vmatmul.bf16.gmra.mxu0 %v599
      %v641 = vpop.f32.mrf.mxu0
      %v642 = vadd.f32 0.0, %v641
      %v643 = vpop.f32.mrf.mxu0
      %v644 = vadd.f32 0.0, %v643
      %645 = vmatmul.bf16.gmra.mxu0 %v602
      %v646 = vpop.f32.mrf.mxu0
      %v647 = vadd.f32 0.0, %v646
      %v648 = vpop.f32.mrf.mxu0
      %v649 = vadd.f32 0.0, %v648
      %650 = vmatmul.bf16.gmra.mxu0 %v605
      %v651 = vpop.f32.mrf.mxu0
      %v652 = vadd.f32 0.0, %v651
      %v653 = vpop.f32.mrf.mxu0
      %v654 = vadd.f32 0.0, %v653
      %655 = vmatmul.bf16.gmra.mxu0 %v608
      %v656 = vpop.f32.mrf.mxu0
      %v657 = vadd.f32 0.0, %v656
      %v658 = vpop.f32.mrf.mxu0
      %v659 = vadd.f32 0.0, %v658
      %660 = vmatmul.bf16.gmra.mxu0 %v611
      %v661 = vpop.f32.mrf.mxu0
      %v662 = vadd.f32 0.0, %v661
      %v663 = vpop.f32.mrf.mxu0
      %v664 = vadd.f32 0.0, %v663
      %665 = vdwg.mxu0
      %v682 = vunpack.c.l.b16 %v563
      %v683 = vunpack.c.l.b16 %v564
      %v684 = vunpack.c.l.b16 %v565
      %v685 = vunpack.c.l.b16 %v566
      %v686 = vunpack.c.l.b16 %v567
      %v687 = vunpack.c.l.b16 %v568
      %v688 = vunpack.c.l.b16 %v569
      %v689 = vunpack.c.l.b16 %v570
      %v690 = vunpack.c.l.b16 %v571
      %v691 = vunpack.c.l.b16 %v572
      %v692 = vunpack.c.l.b16 %v573
      %v693 = vunpack.c.l.b16 %v574
      %v694 = vunpack.c.l.b16 %v575
      %v695 = vunpack.c.l.b16 %v576
      %v696 = vunpack.c.l.b16 %v577
      %v697 = vunpack.c.l.b16 %v578
      %v698 = vpack.c.b16 %v683, %v682
      %v699 = vpack.c.b16 %v685, %v684
      %v700 = vpack.c.b16 %v687, %v686
      %v701 = vpack.c.b16 %v689, %v688
      %v702 = vpack.c.b16 %v691, %v690
      %v703 = vpack.c.b16 %v693, %v692
      %v704 = vpack.c.b16 %v695, %v694
      %v705 = vpack.c.b16 %v697, %v696
      %714 = vmatpush.bf16.msra.mxu0 %v705
      %715 = vmatpush.bf16.msra.mxu0 %v704
      %716 = vmatpush.bf16.msra.mxu0 %v703
      %717 = vmatpush.bf16.msra.mxu0 %v702
      %718 = vmatpush.bf16.msra.mxu0 %v701
      %719 = vmatpush.bf16.msra.mxu0 %v700
      %720 = vmatpush.bf16.msra.mxu0 %v699
      %721 = vmatpush.bf16.msra.mxu0 %v698
      %722 = vmatmul.bf16.gmra.mxu0 %v555
      %v723 = vpop.f32.mrf.mxu0
      %v724 = vadd.f32 %v627, %v723
      %v725 = vpop.f32.mrf.mxu0
      %v726 = vadd.f32 %v629, %v725
      %727 = vmatmul.bf16.gmra.mxu0 %v556
      %v728 = vpop.f32.mrf.mxu0
      %v729 = vadd.f32 %v632, %v728
      %v730 = vpop.f32.mrf.mxu0
      %v731 = vadd.f32 %v634, %v730
      %732 = vmatmul.bf16.gmra.mxu0 %v557
      %v733 = vpop.f32.mrf.mxu0
      %v734 = vadd.f32 %v637, %v733
      %v735 = vpop.f32.mrf.mxu0
      %v736 = vadd.f32 %v639, %v735
      %737 = vmatmul.bf16.gmra.mxu0 %v558
      %v738 = vpop.f32.mrf.mxu0
      %v739 = vadd.f32 %v642, %v738
      %v740 = vpop.f32.mrf.mxu0
      %v741 = vadd.f32 %v644, %v740
      %742 = vmatmul.bf16.gmra.mxu0 %v559
      %v743 = vpop.f32.mrf.mxu0
      %v744 = vadd.f32 %v647, %v743
      %v745 = vpop.f32.mrf.mxu0
      %v746 = vadd.f32 %v649, %v745
      %747 = vmatmul.bf16.gmra.mxu0 %v560
      %v748 = vpop.f32.mrf.mxu0
      %v749 = vadd.f32 %v652, %v748
      %v750 = vpop.f32.mrf.mxu0
      %v751 = vadd.f32 %v654, %v750
      %752 = vmatmul.bf16.gmra.mxu0 %v561
      %v753 = vpop.f32.mrf.mxu0
      %v754 = vadd.f32 %v657, %v753
      %v755 = vpop.f32.mrf.mxu0
      %v756 = vadd.f32 %v659, %v755
      %757 = vmatmul.bf16.gmra.mxu0 %v562
      %v758 = vpop.f32.mrf.mxu0
      %v759 = vadd.f32 %v662, %v758
      %v760 = vpop.f32.mrf.mxu0
      %v761 = vadd.f32 %v664, %v760
      %762 = vdwg.mxu0
      %v763 = vld [vmem:[%s6] sm:$0x1]
      %v765 = vperm.slane %v763, 0
      %v767 = vadd.f32 %v724, %v765
      %v768 = vadd.f32 %v726, %v765
      %v769 = vadd.f32 %v729, %v765
      %v770 = vadd.f32 %v731, %v765
      %v771 = vadd.f32 %v734, %v765
      %v772 = vadd.f32 %v736, %v765
      %v773 = vadd.f32 %v739, %v765
      %v774 = vadd.f32 %v741, %v765
      %v775 = vadd.f32 %v744, %v765
      %v776 = vadd.f32 %v746, %v765
      %v777 = vadd.f32 %v749, %v765
      %v778 = vadd.f32 %v751, %v765
      %v779 = vadd.f32 %v754, %v765
      %v780 = vadd.f32 %v756, %v765
      %v781 = vadd.f32 %v759, %v765
      %v782 = vadd.f32 %v761, %v765
      %v783 = vmax.f32 %v767, 0.0
      %v784 = vmax.f32 %v768, 0.0
      %v785 = vmax.f32 %v769, 0.0
      %v786 = vmax.f32 %v770, 0.0
      %v787 = vmax.f32 %v771, 0.0
      %v788 = vmax.f32 %v772, 0.0
      %v789 = vmax.f32 %v773, 0.0
      %v790 = vmax.f32 %v774, 0.0
      %v791 = vmax.f32 %v775, 0.0
      %v792 = vmax.f32 %v776, 0.0
      %v793 = vmax.f32 %v777, 0.0
      %v794 = vmax.f32 %v778, 0.0
      %v795 = vmax.f32 %v779, 0.0
      %v796 = vmax.f32 %v780, 0.0
      %v797 = vmax.f32 %v781, 0.0
      %v798 = vmax.f32 %v782, 0.0
      %v799 = vpack.c.bf16 %v784, %v783
      %v800 = vpack.c.bf16 %v786, %v785
      %v801 = vpack.c.bf16 %v788, %v787
      %v802 = vpack.c.bf16 %v790, %v789
      %v803 = vpack.c.bf16 %v792, %v791
      %v804 = vpack.c.bf16 %v794, %v793
      %v805 = vpack.c.bf16 %v796, %v795
      %v806 = vpack.c.bf16 %v798, %v797
      %v807 = vld [vmem:[%s7] sm:$0xf]
      %v808 = vld [vmem:[%s7 + $0x4] sm:$0xf]
      %v809 = vld [vmem:[%s7 + $0x8] sm:$0xf]
      %v810 = vld [vmem:[%s7 + $0xc] sm:$0xf]
      %v811 = vld [vmem:[%s7 + $0x10] sm:$0xf]
      %v812 = vld [vmem:[%s7 + $0x14] sm:$0xf]
      %v813 = vld [vmem:[%s7 + $0x18] sm:$0xf]
      %v814 = vld [vmem:[%s7 + $0x1c] sm:$0xf]
      %v815 = vld [vmem:[%s7 + $0x20] sm:$0xf]
      %v816 = vld [vmem:[%s7 + $0x24] sm:$0xf]
      %v817 = vld [vmem:[%s7 + $0x28] sm:$0xf]
      %v818 = vld [vmem:[%s7 + $0x2c] sm:$0xf]
      %v819 = vld [vmem:[%s7 + $0x30] sm:$0xf]
      %v820 = vld [vmem:[%s7 + $0x34] sm:$0xf]
      %v821 = vld [vmem:[%s7 + $0x38] sm:$0xf]
      %v822 = vld [vmem:[%s7 + $0x3c] sm:$0xf]
      %v823 = vld [vmem:[%s8] sm:$0x1]
      %v825 = vperm.slane %v823, 0
      %v843 = vunpack.c.l.b16 %v807
      %v844 = vunpack.c.l.b16 %v808
      %v845 = vunpack.c.l.b16 %v809
      %v846 = vunpack.c.l.b16 %v810
      %v847 = vunpack.c.l.b16 %v811
      %v848 = vunpack.c.l.b16 %v812
      %v849 = vunpack.c.l.b16 %v813
      %v850 = vunpack.c.l.b16 %v814
      %v851 = vunpack.c.l.b16 %v815
      %v852 = vunpack.c.l.b16 %v816
      %v853 = vunpack.c.l.b16 %v817
      %v854 = vunpack.c.l.b16 %v818
      %v855 = vunpack.c.l.b16 %v819
      %v856 = vunpack.c.l.b16 %v820
      %v857 = vunpack.c.l.b16 %v821
      %v858 = vunpack.c.l.b16 %v822
      %v859 = vpack.c.b16 %v844, %v843
      %v860 = vpack.c.b16 %v846, %v845
      %v861 = vpack.c.b16 %v848, %v847
      %v862 = vpack.c.b16 %v850, %v849
      %v863 = vpack.c.b16 %v852, %v851
      %v864 = vpack.c.b16 %v854, %v853
      %v865 = vpack.c.b16 %v856, %v855
      %v866 = vpack.c.b16 %v858, %v857
      %875 = vmatpush.bf16.msra.mxu0 %v866
      %876 = vmatpush.bf16.msra.mxu0 %v865
      %877 = vmatpush.bf16.msra.mxu0 %v864
      %878 = vmatpush.bf16.msra.mxu0 %v863
      %879 = vmatpush.bf16.msra.mxu0 %v862
      %880 = vmatpush.bf16.msra.mxu0 %v861
      %881 = vmatpush.bf16.msra.mxu0 %v860
      %882 = vmatpush.bf16.msra.mxu0 %v859
      %883 = vmatmul.bf16.gmra.mxu0 %v799
      %v884 = vpop.f32.mrf.mxu0
      %v885 = vadd.f32 %v825, %v884
      %v886 = vpop.f32.mrf.mxu0
      %v887 = vadd.f32 %v825, %v886
      %888 = vmatmul.bf16.gmra.mxu0 %v800
      %v889 = vpop.f32.mrf.mxu0
      %v890 = vadd.f32 %v825, %v889
      %v891 = vpop.f32.mrf.mxu0
      %v892 = vadd.f32 %v825, %v891
      %893 = vmatmul.bf16.gmra.mxu0 %v801
      %v894 = vpop.f32.mrf.mxu0
      %v895 = vadd.f32 %v825, %v894
      %v896 = vpop.f32.mrf.mxu0
      %v897 = vadd.f32 %v825, %v896
      %898 = vmatmul.bf16.gmra.mxu0 %v802
      %v899 = vpop.f32.mrf.mxu0
      %v900 = vadd.f32 %v825, %v899
      %v901 = vpop.f32.mrf.mxu0
      %v902 = vadd.f32 %v825, %v901
      %903 = vmatmul.bf16.gmra.mxu0 %v803
      %v904 = vpop.f32.mrf.mxu0
      %v905 = vadd.f32 %v825, %v904
      %v906 = vpop.f32.mrf.mxu0
      %v907 = vadd.f32 %v825, %v906
      %908 = vmatmul.bf16.gmra.mxu0 %v804
      %v909 = vpop.f32.mrf.mxu0
      %v910 = vadd.f32 %v825, %v909
      %v911 = vpop.f32.mrf.mxu0
      %v912 = vadd.f32 %v825, %v911
      %913 = vmatmul.bf16.gmra.mxu0 %v805
      %v914 = vpop.f32.mrf.mxu0
      %v915 = vadd.f32 %v825, %v914
      %v916 = vpop.f32.mrf.mxu0
      %v917 = vadd.f32 %v825, %v916
      %918 = vmatmul.bf16.gmra.mxu0 %v806
      %v919 = vpop.f32.mrf.mxu0
      %v920 = vadd.f32 %v825, %v919
      %v921 = vpop.f32.mrf.mxu0
      %v922 = vadd.f32 %v825, %v921
      %923 = vdwg.mxu0
      %v924 = vmax.f32 %v885, 0.0
      %v925 = vmax.f32 %v887, 0.0
      %v926 = vmax.f32 %v890, 0.0
      %v927 = vmax.f32 %v892, 0.0
      %v928 = vmax.f32 %v895, 0.0
      %v929 = vmax.f32 %v897, 0.0
      %v930 = vmax.f32 %v900, 0.0
      %v931 = vmax.f32 %v902, 0.0
      %v932 = vmax.f32 %v905, 0.0
      %v933 = vmax.f32 %v907, 0.0
      %v934 = vmax.f32 %v910, 0.0
      %v935 = vmax.f32 %v912, 0.0
      %v936 = vmax.f32 %v915, 0.0
      %v937 = vmax.f32 %v917, 0.0
      %v938 = vmax.f32 %v920, 0.0
      %v939 = vmax.f32 %v922, 0.0
      %v940 = vpack.c.bf16 %v925, %v924
      %v941 = vpack.c.bf16 %v927, %v926
      %v942 = vpack.c.bf16 %v929, %v928
      %v943 = vpack.c.bf16 %v931, %v930
      %v944 = vpack.c.bf16 %v933, %v932
      %v945 = vpack.c.bf16 %v935, %v934
      %v946 = vpack.c.bf16 %v937, %v936
      %v947 = vpack.c.bf16 %v939, %v938
      %v948 = vld [vmem:[%s9] sm:$0xf]
      %v949 = vld [vmem:[%s9 + $0x4] sm:$0xf]
      %v950 = vld [vmem:[%s9 + $0x8] sm:$0xf]
      %v951 = vld [vmem:[%s9 + $0xc] sm:$0xf]
      %v952 = vld [vmem:[%s9 + $0x10] sm:$0xf]
      %v953 = vld [vmem:[%s9 + $0x14] sm:$0xf]
      %v954 = vld [vmem:[%s9 + $0x18] sm:$0xf]
      %v955 = vld [vmem:[%s9 + $0x1c] sm:$0xf]
      %v956 = vld [vmem:[%s9 + $0x20] sm:$0xf]
      %v957 = vld [vmem:[%s9 + $0x24] sm:$0xf]
      %v958 = vld [vmem:[%s9 + $0x28] sm:$0xf]
      %v959 = vld [vmem:[%s9 + $0x2c] sm:$0xf]
      %v960 = vld [vmem:[%s9 + $0x30] sm:$0xf]
      %v961 = vld [vmem:[%s9 + $0x34] sm:$0xf]
      %v962 = vld [vmem:[%s9 + $0x38] sm:$0xf]
      %v963 = vld [vmem:[%s9 + $0x3c] sm:$0xf]
      %v964 = vld [vmem:[%s10] sm:$0x1]
      %v966 = vperm.slane %v964, 0
      %v984 = vunpack.c.l.b16 %v948
      %v985 = vunpack.c.l.b16 %v949
      %v986 = vunpack.c.l.b16 %v950
      %v987 = vunpack.c.l.b16 %v951
      %v988 = vunpack.c.l.b16 %v952
      %v989 = vunpack.c.l.b16 %v953
      %v990 = vunpack.c.l.b16 %v954
      %v991 = vunpack.c.l.b16 %v955
      %v992 = vunpack.c.l.b16 %v956
      %v993 = vunpack.c.l.b16 %v957
      %v994 = vunpack.c.l.b16 %v958
      %v995 = vunpack.c.l.b16 %v959
      %v996 = vunpack.c.l.b16 %v960
      %v997 = vunpack.c.l.b16 %v961
      %v998 = vunpack.c.l.b16 %v962
      %v999 = vunpack.c.l.b16 %v963
      %v1000 = vpack.c.b16 %v985, %v984
      %v1001 = vpack.c.b16 %v987, %v986
      %v1002 = vpack.c.b16 %v989, %v988
      %v1003 = vpack.c.b16 %v991, %v990
      %v1004 = vpack.c.b16 %v993, %v992
      %v1005 = vpack.c.b16 %v995, %v994
      %v1006 = vpack.c.b16 %v997, %v996
      %v1007 = vpack.c.b16 %v999, %v998
      %1016 = vmatpush.bf16.msra.mxu0 %v1007
      %1017 = vmatpush.bf16.msra.mxu0 %v1006
      %1018 = vmatpush.bf16.msra.mxu0 %v1005
      %1019 = vmatpush.bf16.msra.mxu0 %v1004
      %1020 = vmatpush.bf16.msra.mxu0 %v1003
      %1021 = vmatpush.bf16.msra.mxu0 %v1002
      %1022 = vmatpush.bf16.msra.mxu0 %v1001
      %1023 = vmatpush.bf16.msra.mxu0 %v1000
      %1024 = vmatmul.bf16.gmra.mxu0 %v940
      %v1025 = vpop.f32.mrf.mxu0
      %v1026 = vadd.f32 %v966, %v1025
      %v1027 = vpop.f32.mrf.mxu0
      %v1028 = vadd.f32 %v966, %v1027
      %1029 = vmatmul.bf16.gmra.mxu0 %v941
      %v1030 = vpop.f32.mrf.mxu0
      %v1031 = vadd.f32 %v966, %v1030
      %v1032 = vpop.f32.mrf.mxu0
      %v1033 = vadd.f32 %v966, %v1032
      %1034 = vmatmul.bf16.gmra.mxu0 %v942
      %v1035 = vpop.f32.mrf.mxu0
      %v1036 = vadd.f32 %v966, %v1035
      %v1037 = vpop.f32.mrf.mxu0
      %v1038 = vadd.f32 %v966, %v1037
      %1039 = vmatmul.bf16.gmra.mxu0 %v943
      %v1040 = vpop.f32.mrf.mxu0
      %v1041 = vadd.f32 %v966, %v1040
      %v1042 = vpop.f32.mrf.mxu0
      %v1043 = vadd.f32 %v966, %v1042
      %1044 = vmatmul.bf16.gmra.mxu0 %v944
      %v1045 = vpop.f32.mrf.mxu0
      %v1046 = vadd.f32 %v966, %v1045
      %v1047 = vpop.f32.mrf.mxu0
      %v1048 = vadd.f32 %v966, %v1047
      %1049 = vmatmul.bf16.gmra.mxu0 %v945
      %v1050 = vpop.f32.mrf.mxu0
      %v1051 = vadd.f32 %v966, %v1050
      %v1052 = vpop.f32.mrf.mxu0
      %v1053 = vadd.f32 %v966, %v1052
      %1054 = vmatmul.bf16.gmra.mxu0 %v946
      %v1055 = vpop.f32.mrf.mxu0
      %v1056 = vadd.f32 %v966, %v1055
      %v1057 = vpop.f32.mrf.mxu0
      %v1058 = vadd.f32 %v966, %v1057
      %1059 = vmatmul.bf16.gmra.mxu0 %v947
      %v1060 = vpop.f32.mrf.mxu0
      %v1061 = vadd.f32 %v966, %v1060
      %v1062 = vpop.f32.mrf.mxu0
      %v1063 = vadd.f32 %v966, %v1062
      %1064 = vdwg.mxu0
      %1065 = vst [vmem:[%s410] sm:$0xff] %v1026
      %1066 = vst [vmem:[%s410 + $0x8] sm:$0xff] %v1028
      %1067 = vst [vmem:[%s410 + $0x10] sm:$0xff] %v1031
      %1068 = vst [vmem:[%s410 + $0x18] sm:$0xff] %v1033
      %1069 = vst [vmem:[%s410 + $0x20] sm:$0xff] %v1036
      %1070 = vst [vmem:[%s410 + $0x28] sm:$0xff] %v1038
      %1071 = vst [vmem:[%s410 + $0x30] sm:$0xff] %v1041
      %1072 = vst [vmem:[%s410 + $0x38] sm:$0xff] %v1043
      %1073 = vst [vmem:[%s410 + $0x40] sm:$0xff] %v1046
      %1074 = vst [vmem:[%s410 + $0x48] sm:$0xff] %v1048
      %1075 = vst [vmem:[%s410 + $0x50] sm:$0xff] %v1051
      %1076 = vst [vmem:[%s410 + $0x58] sm:$0xff] %v1053
      %1077 = vst [vmem:[%s410 + $0x60] sm:$0xff] %v1056
      %1078 = vst [vmem:[%s410 + $0x68] sm:$0xff] %v1058
      %1079 = vst [vmem:[%s410 + $0x70] sm:$0xff] %v1061
      %1080 = vst [vmem:[%s410 + $0x78] sm:$0xff] %v1063
      %s1081 = smul.u32 16, %s22
      %p1082 = scmp.lt.s32.totalorder %s1081, 31
      %s1083 = scalar_select %p1082, %s1081, 31
      %s1084 = smul.addr %s1083, 8
      %s1085 = scalar_lea.vmem %s11, %s1084
      // Predicated region
      $region65: #{critic_forward.1} parent=63 // pred_check
        %p1086 = pneg %p281
      $region66: #{critic_forward.1} parent=63 // pred_check_branch
        %1088 = sbr.rel (%p1086) target = $region68
      $region67: #{critic_forward.1} parent=63 // pred_region
        %s1089 = smul.u32 16, %s22
      $region68: #{critic_forward.1} parent=63 // pred_fallthru
        _
    $region64: #{critic_forward.1} parent=5 // pred_fallthru
      _
    %p1090 = scmp.le.s32.totalorder 2, %s17
    // Predicated region
    $region69: #{critic_forward.1} parent=5 // pred_check
      %p1091 = pneg %p1090
    $region70: #{critic_forward.1} parent=5 // pred_check_branch
      %1093 = sbr.rel (%p1091) target = $region72
    $region71: #{critic_forward.1} parent=5 // pred_region
      %s1094 = ssub.s32 %s17, 2
      // Predicated region
      $region73: #{critic_forward.1} parent=71 // pred_check
        %p1095 = pneg %p287
      $region74: #{critic_forward.1} parent=71 // pred_check_branch
        %1097 = sbr.rel (%p1095) target = $region76
      $region75: #{critic_forward.1} parent=71 // pred_region
        %s1098 = smul.u32 16, %s23
        %p1099 = scmp.lt.s32.totalorder %s1098, 31
        %s1100 = scalar_select %p1099, %s1098, 31
        %s1101 = smul.addr %s1100, 8
        %s1102 = scalar_lea.vmem %s11, %s1101
      $region76: #{critic_forward.1} parent=71 // pred_fallthru
        _
    $region72: #{critic_forward.1} parent=5 // pred_fallthru
      _
  $region6: #{critic_forward.1} parent=0 // loop_footer
    %s21 = sadd.s32 1, %s17
  $region7: #{critic_forward.1} parent=0 // loop_footer_branch
    %16 = sbr.rel target = $region3
  $region8: #{critic_forward.1} parent=0 // loop_exit
    _

</llo_original>
